<compile_context>
chip_gen: v7x
topology: tpu7x:2x2x1
jax: 0.10.0
libtpu: 0.0.40
codegen_flags: <defaults>
</compile_context>

<pallas_src>
import math

import jax
import jax.numpy as jnp
from jax.experimental import pallas as pl
from jax.experimental.pallas import tpu as pltpu

_LANES = 128


def _layer_scale_kernel(x_ref, gamma_ref, o_ref):
    # x_ref: (TR, Dp) tile; gamma_ref: (1, Dp) VMEM-resident row -> broadcast multiply.
    o_ref[...] = x_ref[...] * gamma_ref[...]


def _pick_tile_bytes() -> int:
    """Generation-aware row-tile byte budget (fits scoped-VMEM defaults everywhere)."""
    try:
        kind = jax.devices()[0].device_kind.lower()
    except Exception:
        kind = ""
    if any(tag in kind for tag in ("v6", "v7", "7x")):
        # v6e/v7x: 32 MiB scoped default; 2 x (2 x 4 MiB) double-buffered tiles = 16 MiB.
        return 4 * 1024 * 1024
    # v5e (16 MiB scoped default) and unknown chips: 2 MiB tiles are near roofline.
    return 2 * 1024 * 1024


def layer_scale(x: jax.Array, gamma: jax.Array, *,
                inplace: bool = False,
                target_tile_bytes: int | None = None,
                min_pallas_bytes: int = 1 << 20) -> jax.Array:
    """Applies x * gamma where gamma has shape (dim,) matching x's last dim."""
    assert x.shape[-1] == gamma.shape[-1]
    orig_shape = x.shape
    dim = x.shape[-1]
    rows = math.prod(x.shape[:-1]) if x.ndim > 1 else 1
    dtype = x.dtype
    itemsize = jnp.dtype(dtype).itemsize
    gamma = gamma.astype(dtype)

    # Fast path: for tiny tensors the fixed pallas_call / DMA-setup cost dominates
    # and XLA fuses the broadcast multiply into neighbours for free.
    if rows * dim * itemsize < min_pallas_bytes:
        return x * gamma

    if target_tile_bytes is None:
        target_tile_bytes = _pick_tile_bytes()

    # --- Lane-dense packing: fold k consecutive rows into one row of width k*dim,
    #     the smallest multiple of 128, so every store is an unmasked full-lane vst.
    k = _LANES // math.gcd(dim, _LANES)
    dim_p = dim * k                              # multiple of 128 by construction
    gamma_row = (jnp.tile(gamma, k) if k > 1 else gamma).reshape(1, dim_p)

    # --- Row-tile selection: ~target_tile_bytes per block, sublane-aligned. ---
    sub = 8 * max(1, 4 // itemsize)              # 8 (f32) / 16 (bf16) / 32 (1-byte dtypes)
    row_bytes = dim_p * itemsize
    tr = max(sub, (target_tile_bytes // max(row_bytes, 1)) // sub * sub)

    pad_rows = (-rows) % k                       # rows needed so rows % k == 0
    rows_p = (rows + pad_rows) // k              # packed row count

    # Keep >=2 grid steps when possible so v7x can shard the loop across both TCs.
    if rows_p > sub:
        half = -(-((rows_p + 1) // 2) // sub) * sub
        tr = min(tr, max(sub, half))
    tr = min(tr, rows_p)                         # if clipped, block == full array -> legal

    # If we must pad anyway, pad slightly more so every grid block is full
    # (keeps the trailing block on the unmasked-store path; < 1 tile extra HBM).
    if pad_rows and rows_p % tr:
        extra = tr - rows_p % tr
        pad_rows += extra * k
        rows_p += extra

    x2d = x.reshape(rows, dim)
    if pad_rows:
        x2d = jnp.pad(x2d, ((0, pad_rows), (0, 0)))
    x2d = x2d.reshape(rows_p, dim_p)

    grid = (pl.cdiv(rows_p, tr),)

    out = pl.pallas_call(
        _layer_scale_kernel,
        out_shape=jax.ShapeDtypeStruct((rows_p, dim_p), dtype),
        grid_spec=pltpu.PrefetchScalarGridSpec(
            num_scalar_prefetch=0,
            grid=grid,
            in_specs=[
                pl.BlockSpec((tr, dim_p), lambda i: (i, 0)),
                pl.BlockSpec((1, dim_p), lambda i: (0, 0)),   # gamma stays VMEM-resident
            ],
            out_specs=pl.BlockSpec((tr, dim_p), lambda i: (i, 0)),
        ),
        compiler_params=pltpu.CompilerParams(
            dimension_semantics=("parallel",),   # rows independent -> megacore / 2-TC OK
        ),
        cost_estimate=pl.CostEstimate(
            flops=rows_p * dim_p,
            transcendentals=0,
            bytes_accessed=2 * rows_p * dim_p * itemsize + dim_p * itemsize,
        ),
        # PyTorch inplace=True (x.mul_(gamma)): alias the packed input with the
        # output, halving peak HBM footprint.  Only valid when the caller donates x
        # (always safe when the row-pad copy was taken, since x2d is an intermediate).
        input_output_aliases=({0: 0} if inplace else {}),
    )(x2d, gamma_row)

    if pad_rows:
        out = out.reshape(rows + pad_rows, dim)[:rows]
    return out.reshape(orig_shape)


if __name__ == "__main__":
    # Module init: gamma = init_values * ones(dim)
    init_values = 1e-05
    key = jax.random.PRNGKey(0)
    k1, k2 = jax.random.split(key)

    # Case 1: dim=32 (not a multiple of 128) -> 4-row lane packing, no padding needed.
    B, S, D = 2, 8, 32
    x = jax.random.normal(k1, (B, S, D), dtype=jnp.float32)
    gamma = init_values * jnp.ones((D,), dtype=jnp.float32)
    y = layer_scale(x, gamma, min_pallas_bytes=0)   # force the Pallas path for the demo
    jax.block_until_ready(y)
    assert y.shape == x.shape
    assert jnp.allclose(y, x * gamma, rtol=1e-6, atol=1e-6)

    # Case 2: rows not divisible by the packing factor -> row-pad + slice path.
    x2 = jax.random.normal(k2, (3, 7, 48), dtype=jnp.float32)
    gamma2 = init_values * jnp.ones((48,), dtype=jnp.float32)
    y2 = layer_scale(x2, gamma2, min_pallas_bytes=0)
    jax.block_until_ready(y2)
    assert y2.shape == x2.shape
    assert jnp.allclose(y2, x2 * gamma2, rtol=1e-6, atol=1e-6)

    # Case 3: default small-input bypass (plain XLA broadcast multiply).
    y3 = layer_scale(x, gamma)
    jax.block_until_ready(y3)
    assert jnp.allclose(y3, x * gamma, rtol=1e-6, atol=1e-6)

    print("KERNEL_OK")
</pallas_src>

<mosaic_0001>
module attributes {stable_mosaic.version = 11 : i64} {
  func.func @_layer_scale_kernel(%arg0: i32, %arg1: memref<4x128xf32, #tpu.memory_space<vmem>>, %arg2: memref<1x128xf32, #tpu.memory_space<vmem>>, %arg3: memref<4x128xf32, #tpu.memory_space<vmem>>) attributes {dimension_semantics = [#tpu.dimension_semantics<parallel>], iteration_bounds = array<i64: 1>, scalar_prefetch = 0 : i64, scratch_operands = 0 : i64, tpu.core_type = #tpu.core_type<tc>, window_params = [{transform_indices = @transform_0, window_bounds = array<i64: 4, 128>}, {pipeline_mode = #tpu.pipeline_mode<synchronous>, transform_indices = @transform_1, window_bounds = array<i64: 1, 128>}, {transform_indices = @transform_2, window_bounds = array<i64: 4, 128>}]} {
    %c0 = arith.constant 0 : index
    %c0_0 = arith.constant 0 : index
    %0 = vector.load %arg1[%c0, %c0_0] : memref<4x128xf32, #tpu.memory_space<vmem>>, vector<4x128xf32>
    %c0_1 = arith.constant 0 : index
    %c0_2 = arith.constant 0 : index
    %1 = vector.load %arg2[%c0_1, %c0_2] : memref<1x128xf32, #tpu.memory_space<vmem>>, vector<1x128xf32>
    %2 = vector.broadcast %1 : vector<1x128xf32> to vector<4x128xf32>
    %3 = arith.mulf %0, %2 : vector<4x128xf32>
    %c0_3 = arith.constant 0 : index
    %c0_4 = arith.constant 0 : index
    %4 = vector.load %arg3[%c0_3, %c0_4] : memref<4x128xf32, #tpu.memory_space<vmem>>, vector<4x128xf32>
    tpu.vector_store %arg3[%c0_3, %c0_4], %3 {strides = array<i32>} : memref<4x128xf32, #tpu.memory_space<vmem>>, vector<4x128xf32>,
    return
  }
  func.func @transform_0(%arg0: i32) -> (i32, i32) {
    %c0_i32 = arith.constant 0 : i32
    %c0_i32_0 = arith.constant 0 : i32
    return %arg0, %c0_i32 : i32, i32
  }
  func.func @transform_1(%arg0: i32) -> (i32, i32) {
    %c0_i32 = arith.constant 0 : i32
    %c0_i32_0 = arith.constant 0 : i32
    %c0_i32_1 = arith.constant 0 : i32
    return %c0_i32, %c0_i32_0 : i32, i32
  }
  func.func @transform_2(%arg0: i32) -> (i32, i32) {
    %c0_i32 = arith.constant 0 : i32
    %c0_i32_0 = arith.constant 0 : i32
    return %arg0, %c0_i32 : i32, i32
  }
}

</mosaic_0001>

<llo_original>
// kernel: tpu_custom_call.1
$region0: #{tpu_custom_call.1}
  #allocation0 [shape = 'u32[]', space=smem, size = 0x4, offset = 0x4, fixed_abs, tag = 'smem constant byte address 0x4 - core index']
  #allocation1 [shape = 'u32[144,128]{1,0:T(1,128)}', space=vmem, size = 0x12000, scoped, tag = 'internal scratch']
  %s0 = inlined_call_operand.hbm [shape: f32[4,128], index: 0, kind: input, shape index: {}]
  %s1 = inlined_call_operand.vmem [shape: f32[1,128], index: 1, kind: input, shape index: {}]
  %s2 = inlined_call_operand.hbm [shape: f32[4,128], index: 2, kind: output, shape index: {}]
  %s3 = sld [smem:[#allocation0]]
  $region22: #{tpu_custom_call.1} parent=0
    _
  %s5 = ssub.s32 1, %s3
  %s6 = scalar_select 0, %s5, %s3
  $region1: #{tpu_custom_call.1} parent=0
    #allocation2 [shape = 'u8[2048]{0}', space=vmem, size = 0x800, scoped, tag = 'input window, operand 0, single buffered']
    #allocation3 [shape = 's32[1]{0}', space=sflag, size = 0x4, scoped, tag = 'scoped memory for tpu_custom_call.1']
    #allocation4 [shape = 's32[1]{0}', space=sflag, size = 0x4, scoped, tag = 'scoped memory for tpu_custom_call.1']
    #allocation5 [shape = 'u8[2048]{0}', space=vmem, size = 0x800, scoped, tag = 'output window, operand 0, single buffered']
    %7 = vsyncpa [#allocation3], 0
    %8 = vsyncpa [#allocation4], 0
    // Predicated region
    $region2: #{tpu_custom_call.1} parent=1 // pred_check
      _
    $region3: #{tpu_custom_call.1} parent=1 // pred_check_branch
      %10 = sbr.rel (0) target = $region5
    $region4: #{tpu_custom_call.1} parent=1 // pred_region
      %s12 = ssub.s32 64, 64
      %13 = vsyncadd [#allocation3], %s12
      %s15 = sshll.u32 [#allocation2], 4
      %s16 = int_to_ptr.vmem [resolvable:$true] %s15
      %18 = dma.hbm_to_vmem [thread:$0]  %s0, 64, %s16, [#allocation3]
    $region5: #{tpu_custom_call.1} parent=1 // pred_fallthru
      _
    // Predicated region
    $region6: #{tpu_custom_call.1} parent=1 // pred_check
      _
    $region7: #{tpu_custom_call.1} parent=1 // pred_check_branch
      %20 = sbr.rel (0) target = $region9
    $region8: #{tpu_custom_call.1} parent=1 // pred_region
      _
    $region9: #{tpu_custom_call.1} parent=1 // pred_fallthru
      _
    // Predicated region
    $region10: #{tpu_custom_call.1} parent=1 // pred_check
      _
    $region11: #{tpu_custom_call.1} parent=1 // pred_check_branch
      %22 = sbr.rel (0) target = $region13
    $region12: #{tpu_custom_call.1} parent=1 // pred_region
      %23 = dma.done [#allocation3], 64
    $region13: #{tpu_custom_call.1} parent=1 // pred_fallthru
      _
    %v24 = vld [vmem:[#allocation2] sm:$0xf]
    %v25 = vld [vmem:[%s1] sm:$0x1]
    %v27 = vlaneseq
    %v28 = vshrl.u32 %v27, 7
    %v29 = vsub.s32 0, %v28
    %v30 = vrot.slane %v25, %v29
    %v32 = vmul.f32 %v24, %v30
    %33 = vst [vmem:[#allocation5] sm:$0xf] %v32
    // Predicated region
    $region14: #{tpu_custom_call.1} parent=1 // pred_check
      _
    $region15: #{tpu_custom_call.1} parent=1 // pred_check_branch
      %35 = sbr.rel (0) target = $region17
    $region16: #{tpu_custom_call.1} parent=1 // pred_region
      %s37 = ssub.s32 64, 64
      %38 = vsyncadd [#allocation4], %s37
      %s40 = sshll.u32 [#allocation5], 4
      %s41 = int_to_ptr.vmem [resolvable:$true] %s40
      %43 = dma.vmem_to_hbm [thread:$0]  %s41, 64, %s2, [#allocation4]
    $region17: #{tpu_custom_call.1} parent=1 // pred_fallthru
      _
    // Predicated region
    $region18: #{tpu_custom_call.1} parent=1 // pred_check
      _
    $region19: #{tpu_custom_call.1} parent=1 // pred_check_branch
      %45 = sbr.rel (0) target = $region21
    $region20: #{tpu_custom_call.1} parent=1 // pred_region
      %46 = dma.done [#allocation4], 64
    $region21: #{tpu_custom_call.1} parent=1 // pred_fallthru
      _
    %47 = vsyncpa [#allocation3], 1
    %48 = vsyncpa [#allocation4], 1

</llo_original>
